<compile_context>
chip_gen: v6e
topology: v6e:2x2x1
jax: 0.10.0
libtpu: 0.0.40
codegen_flags: <defaults>
</compile_context>

<pallas_src>
import jax
import jax.numpy as jnp
from jax.experimental import pallas as pl
from jax.experimental.pallas import tpu as pltpu


def _smem_scalar_matmul_kernel(x_ref, w_ref, o_ref):
    """out = x @ w for tiny M, K.

    x_ref: SMEM (M, K) — scalar reads, each splats into the VPU multiply.
    w_ref: VMEM (K, N) — row slices are (1, N) vector operands.
    o_ref: VMEM (M, N).
    M and K are static trace-time constants, so both loops fully unroll.
    """
    m_dim, k_dim = x_ref.shape
    for m in range(m_dim):
        row = x_ref[m, 0] * w_ref[0:1, :]          # scalar * (1, N)
        for k in range(1, k_dim):
            row = row + x_ref[m, k] * w_ref[k:k + 1, :]
        o_ref[m:m + 1, :] = row


def _vmem_fma_matmul_kernel(x_ref, w_ref, o_ref):
    """Vectorized fallback for larger M: K-term broadcast FMA on the VPU."""
    x = x_ref[...]                                  # (M, K) float32
    w = w_ref[...]                                  # (K, N) float32
    k_dim = x.shape[1]
    acc = x[:, 0:1] * w[0:1, :]
    for k in range(1, k_dim):
        acc = acc + x[:, k:k + 1] * w[k:k + 1, :]
    o_ref[...] = acc


# Above this M the per-row scalar unroll stops being worth it; fall back to
# the vectorized VPU path (still grid-less, still tiny).
_SMEM_SCALAR_MAX_M = 16


def _pallas_matmul_impl(x: jax.Array, w: jax.Array) -> jax.Array:
    m, k = x.shape
    k2, n = w.shape
    assert k == k2, f"contraction mismatch: {k} vs {k2}"
    assert k >= 1, "K must be >= 1"

    x = x.astype(jnp.float32)
    w = w.astype(jnp.float32)

    cost = pl.CostEstimate(
        flops=2 * m * k * n,
        bytes_accessed=4 * (m * k + k * n + m * n),
        transcendentals=0,
    )

    if m <= _SMEM_SCALAR_MAX_M:
        kernel = _smem_scalar_matmul_kernel
        x_spec = pl.BlockSpec(memory_space=pltpu.MemorySpace.SMEM)
    else:
        kernel = _vmem_fma_matmul_kernel
        x_spec = pl.BlockSpec(memory_space=pltpu.MemorySpace.VMEM)

    return pl.pallas_call(
        kernel,
        out_shape=jax.ShapeDtypeStruct((m, n), jnp.float32),
        # Full-array blocks (block_shape == array shape satisfies the layout
        # rules); no grid, no pipeline prologue.
        in_specs=[
            x_spec,
            pl.BlockSpec(memory_space=pltpu.MemorySpace.VMEM),
        ],
        out_specs=pl.BlockSpec(memory_space=pltpu.MemorySpace.VMEM),
        cost_estimate=cost,
    )(x, w)


pallas_matmul = jax.jit(_pallas_matmul_impl)


class ToyModelJax:
    """JAX mirror of ToyModel: holds a (2, 3) weight filled with 0.5."""

    def __init__(self, weight: bool = True):
        if weight:
            # torch.Tensor(2, 3).fill_(0.5)
            self.weight = jnp.full((2, 3), 0.5, dtype=jnp.float32)
        else:
            self.weight = None

    def __call__(self, x, weight=None):
        w = weight if weight is not None else self.weight
        return pallas_matmul(x, w)


class MyModelJax:
    """JAX mirror of MyModel: re-wraps the weight (no-op), then matmuls."""

    def __init__(self):
        self.toy_model = ToyModelJax(weight=True)

    def __call__(self, x):
        w = self.toy_model.weight
        # Re-wrapping the Parameter is a no-op mathematically; mirror as a
        # plain attribute reassignment.
        self.toy_model.weight = w
        return self.toy_model(x)


if __name__ == "__main__":
    # Deterministic inputs. The PyTorch script uses x = Tensor(1, 2).fill_(0.8);
    # we reproduce that, and also exercise a small random batch from PRNGKey(0).
    key = jax.random.PRNGKey(0)

    model = MyModelJax()

    # Case 1: exactly the module's example input (SMEM scalar path, M=1).
    x_fill = jnp.full((1, 2), 0.8, dtype=jnp.float32)
    y_fill = jax.block_until_ready(model(x_fill))
    ref_fill = x_fill @ model.toy_model.weight
    assert y_fill.shape == (1, 3)
    assert jnp.allclose(y_fill, ref_fill, atol=1e-6), (y_fill, ref_fill)

    # Case 2: a random small batch, same (K=2, N=3) weight (still SMEM path).
    x_rand = jax.random.normal(key, (4, 2), dtype=jnp.float32)
    y_rand = jax.block_until_ready(model(x_rand))
    ref_rand = x_rand @ model.toy_model.weight
    assert y_rand.shape == (4, 3)
    assert jnp.allclose(y_rand, ref_rand, atol=1e-5)

    # Case 3: exercise the vectorized VMEM fallback path (M > threshold).
    x_big = jax.random.normal(key, (32, 2), dtype=jnp.float32)
    y_big = jax.block_until_ready(model(x_big))
    ref_big = x_big @ model.toy_model.weight
    assert y_big.shape == (32, 3)
    assert jnp.allclose(y_big, ref_big, atol=1e-5)

    print("KERNEL_OK")
</pallas_src>

<mosaic_0001>
module attributes {stable_mosaic.version = 11 : i64} {
  func.func @_smem_scalar_matmul_kernel(%arg0: memref<1x2xf32, #tpu.memory_space<smem>>, %arg1: memref<2x3xf32, #tpu.memory_space<vmem>>, %arg2: memref<1x3xf32, #tpu.memory_space<vmem>>) attributes {dimension_semantics = [], scalar_prefetch = 0 : i64, scratch_operands = 0 : i64, tpu.core_type = #tpu.core_type<tc>} {
    %c0 = arith.constant 0 : index
    %c0_0 = arith.constant 0 : index
    %0 = memref.load %arg0[%c0, %c0_0] : memref<1x2xf32, #tpu.memory_space<smem>>
    %c0_1 = arith.constant 0 : index
    %c0_2 = arith.constant 0 : index
    %1 = vector.load %arg1[%c0_1, %c0_2] : memref<2x3xf32, #tpu.memory_space<vmem>>, vector<1x3xf32>
    %2 = vector.broadcast %0 : f32 to vector<1x3xf32>
    %3 = arith.mulf %2, %1 : vector<1x3xf32>
    %c0_3 = arith.constant 0 : index
    %c1 = arith.constant 1 : index
    %4 = memref.load %arg0[%c0_3, %c1] : memref<1x2xf32, #tpu.memory_space<smem>>
    %c1_4 = arith.constant 1 : index
    %c0_5 = arith.constant 0 : index
    %5 = vector.load %arg1[%c1_4, %c0_5] : memref<2x3xf32, #tpu.memory_space<vmem>>, vector<1x3xf32>
    %6 = vector.broadcast %4 : f32 to vector<1x3xf32>
    %7 = arith.mulf %6, %5 : vector<1x3xf32>
    %8 = arith.addf %3, %7 : vector<1x3xf32>
    %c0_6 = arith.constant 0 : index
    %c0_7 = arith.constant 0 : index
    %9 = vector.load %arg2[%c0_6, %c0_7] : memref<1x3xf32, #tpu.memory_space<vmem>>, vector<1x3xf32>
    tpu.vector_store %arg2[%c0_6, %c0_7], %8 {strides = array<i32>} : memref<1x3xf32, #tpu.memory_space<vmem>>, vector<1x3xf32>,
    return
  }
}

</mosaic_0001>

<llo_original>
// kernel: _pallas_matmul_impl.1
$region0: #{_pallas_matmul_impl.1}
  #allocation0 [shape = 'u32[]', space=smem, size = 0x4, offset = 0x4, fixed_abs, tag = 'smem constant byte address 0x4 - core index']
  #allocation1 [shape = 'u32[144,128]{1,0:T(1,128)}', space=vmem, size = 0x12000, scoped, tag = 'internal scratch']
  %s0 = inlined_call_operand.hbm [shape: f32[1,2], index: 0, kind: input, shape index: {}]
  %s1 = inlined_call_operand.hbm [shape: f32[2,3], index: 1, kind: input, shape index: {}]
  %s2 = inlined_call_operand.hbm [shape: f32[1,3], index: 2, kind: output, shape index: {}]
  %s3 = sld [smem:[#allocation0]]
  $region26: #{_pallas_matmul_impl.1} parent=0
    _
  %s5 = ssub.s32 1, %s3
  %s6 = scalar_select 0, %s5, %s3
  $region1: #{_pallas_matmul_impl.1} parent=0
    #allocation2 [shape = 'u8[512]{0}', space=smem, size = 0x200, scoped, tag = 'input window, operand 0, single buffered']
    #allocation3 [shape = 's32[1]{0}', space=sflag, size = 0x4, scoped, tag = 'scoped memory for _pallas_matmul_impl.1']
    #allocation4 [shape = 's32[1]{0}', space=sflag, size = 0x4, scoped, tag = 'scoped memory for _pallas_matmul_impl.1']
    #allocation5 [shape = 's32[1]{0}', space=sflag, size = 0x4, scoped, tag = 'scoped memory for _pallas_matmul_impl.1']
    #allocation6 [shape = 'u8[1024]{0}', space=vmem, size = 0x400, scoped, tag = 'input window, operand 1, single buffered']
    #allocation7 [shape = 'u8[512]{0}', space=vmem, size = 0x400, scoped, tag = 'output window, operand 0, single buffered']
    %7 = vsyncpa [#allocation5], 0
    %8 = vsyncpa [#allocation3], 0
    %9 = vsyncpa [#allocation4], 0
    // Predicated region
    $region2: #{_pallas_matmul_impl.1} parent=1 // pred_check
      _
    $region3: #{_pallas_matmul_impl.1} parent=1 // pred_check_branch
      %11 = sbr.rel (0) target = $region5
    $region4: #{_pallas_matmul_impl.1} parent=1 // pred_region
      %s13 = ssub.s32 16, 16
      %14 = vsyncadd [#allocation5], %s13
      %17 = dma.hbm_to_smem %s0, 16, [#allocation2], [#allocation5]
    $region5: #{_pallas_matmul_impl.1} parent=1 // pred_fallthru
      _
    // Predicated region
    $region6: #{_pallas_matmul_impl.1} parent=1 // pred_check
      _
    $region7: #{_pallas_matmul_impl.1} parent=1 // pred_check_branch
      %19 = sbr.rel (0) target = $region9
    $region8: #{_pallas_matmul_impl.1} parent=1 // pred_region
      %s21 = ssub.s32 32, 32
      %22 = vsyncadd [#allocation3], %s21
      %s24 = sshll.u32 [#allocation6], 4
      %s25 = int_to_ptr.vmem [resolvable:$true] %s24
      %27 = dma.hbm_to_vmem [thread:$0]  %s1, 32, %s25, [#allocation3]
    $region9: #{_pallas_matmul_impl.1} parent=1 // pred_fallthru
      _
    // Predicated region
    $region10: #{_pallas_matmul_impl.1} parent=1 // pred_check
      _
    $region11: #{_pallas_matmul_impl.1} parent=1 // pred_check_branch
      %29 = sbr.rel (0) target = $region13
    $region12: #{_pallas_matmul_impl.1} parent=1 // pred_region
      %30 = dma.done [#allocation5], 16
    $region13: #{_pallas_matmul_impl.1} parent=1 // pred_fallthru
      _
    // Predicated region
    $region14: #{_pallas_matmul_impl.1} parent=1 // pred_check
      _
    $region15: #{_pallas_matmul_impl.1} parent=1 // pred_check_branch
      %32 = sbr.rel (0) target = $region17
    $region16: #{_pallas_matmul_impl.1} parent=1 // pred_region
      %33 = dma.done [#allocation3], 32
    $region17: #{_pallas_matmul_impl.1} parent=1 // pred_fallthru
      _
    %34 = sfence
    %s35 = sld [smem:[#allocation2]]
    %v36 = vld [vmem:[#allocation6] sm:$0x1]
    %v37 = vstv %s35
    %v38 = vmul.f32 %v37, %v36
    %s39 = sld [smem:[#allocation2 + $0x1]]
    %v40 = vld [vmem:[#allocation6 + $0x1] sm:$0x1]
    %v41 = vstv %s39
    %v42 = vmul.f32 %v41, %v40
    %v43 = vadd.f32 %v38, %v42
    %vm44 = vcmask 16384
    %45 = vst.msk [vmem:[#allocation7] sm:$0x1] %vm44, %v43
    // Predicated region
    $region18: #{_pallas_matmul_impl.1} parent=1 // pred_check
      _
    $region19: #{_pallas_matmul_impl.1} parent=1 // pred_check_branch
      %47 = sbr.rel (0) target = $region21
    $region20: #{_pallas_matmul_impl.1} parent=1 // pred_region
      %s49 = ssub.s32 16, 16
      %50 = vsyncadd [#allocation4], %s49
      %s52 = sshll.u32 [#allocation7], 4
      %s53 = int_to_ptr.vmem [resolvable:$true] %s52
      %55 = dma.vmem_to_hbm [thread:$0]  %s53, 16, %s2, [#allocation4]
    $region21: #{_pallas_matmul_impl.1} parent=1 // pred_fallthru
      _
    // Predicated region
    $region22: #{_pallas_matmul_impl.1} parent=1 // pred_check
      _
    $region23: #{_pallas_matmul_impl.1} parent=1 // pred_check_branch
      %57 = sbr.rel (0) target = $region25
    $region24: #{_pallas_matmul_impl.1} parent=1 // pred_region
      %58 = dma.done [#allocation4], 16
    $region25: #{_pallas_matmul_impl.1} parent=1 // pred_fallthru
      _
    %59 = vsyncpa [#allocation3], 1
    %60 = vsyncpa [#allocation4], 1
    %61 = vsyncpa [#allocation5], 1

</llo_original>
